<compile_context>
chip_gen: v7x
topology: tpu7x:2x2x1
jax: 0.10.0
libtpu: 0.0.40
codegen_flags: <defaults>
</compile_context>

<pallas_src>
import functools

import jax
import jax.numpy as jnp
from jax.experimental import pallas as pl
from jax.experimental.pallas import tpu as pltpu


# ----------------------------- Pallas kernel ------------------------------


def _apply_activation(y, act):
    if act == "relu":
        return jnp.maximum(y, 0.0)
    if act == "sigmoid":
        return jax.nn.sigmoid(y)
    if act == "selu":
        return jax.nn.selu(y)
    if act == "softmax":
        # nn.Softmax() implicit dim for 2-D input -> last dim.
        return jax.nn.softmax(y, axis=-1)
    raise ValueError(f"unknown activation {act}")


def _mlp_kernel(x_ref, *refs, layer_num, activation):
    """Fused whole-MLP forward for one batch tile.

    refs = (w0, b0, w1, b1, ..., w_{L-1}, b_{L-1}, out_ref).
    Matmuls run with the weights' (bf16) dtype on the MXU with f32
    accumulation; bias add + activations stay in f32 (v5e-safe).
    """
    o_ref = refs[-1]
    wb = refs[:-1]
    h = x_ref[...]                                          # (tile_b, in_dim)
    for i in range(layer_num):
        w = wb[2 * i][...]                                  # (d_in, d_out)
        b = wb[2 * i + 1][...].astype(jnp.float32)          # (1, d_out)
        y = jnp.dot(h.astype(w.dtype), w,
                    preferred_element_type=jnp.float32) + b
        if i == layer_num - 1:
            h = jax.nn.sigmoid(y)                           # final layer: sigmoid
        else:
            h = _apply_activation(y, activation)            # f32 elementwise
    o_ref[...] = h.astype(o_ref.dtype)


# ----------------------------- host wrapper -------------------------------


def _round_up(v, m):
    return ((v + m - 1) // m) * m


# exp-like ops per activation element (for the cost estimate only)
_ACT_TRANSCENDENTALS = {"relu": 0, "sigmoid": 1, "selu": 1, "softmax": 1}


def actor_forward(x, params, activation, *, batch_tile=4096,
                  small_batch_max=512, weight_dtype=jnp.bfloat16):
    """Fused forward pass: one pallas_call for the whole network.

    Pass `x` already in bf16 on the large-batch path to halve the dominant
    HBM read (the matmuls accumulate in f32 either way).
    """
    batch, in_dim = x.shape
    layer_num = len(params)
    out_dim = params[-1][0].shape[1]

    flat = []
    for w, b in params:
        flat.append(w.astype(weight_dtype))
        flat.append(b.reshape(1, -1).astype(jnp.float32))

    kernel = functools.partial(_mlp_kernel, layer_num=layer_num,
                               activation=activation)

    if batch <= small_batch_max:
        # Single-block latency path: whole problem lives in VMEM, no grid.
        # Cost here is pure pallas_call launch + two tiny DMAs; callers that
        # care should batch more rows per call.
        vmem = pltpu.MemorySpace.VMEM
        return pl.pallas_call(
            kernel,
            out_shape=jax.ShapeDtypeStruct((batch, out_dim), jnp.float32),
            in_specs=[pl.BlockSpec(memory_space=vmem)] * (1 + len(flat)),
            out_specs=pl.BlockSpec(memory_space=vmem),
        )(x, *flat)

    # ---- Batch-tiled path for large batches ----
    # Cap tile_b so the "parallel" grid has at least 2 steps (v7x: 2 TCs).
    tile_b = min(batch_tile, _round_up(pl.cdiv(batch, 2), 8))
    n_tiles = pl.cdiv(batch, tile_b)

    in_specs = [pl.BlockSpec((tile_b, in_dim), lambda i: (i, 0))]
    for arr in flat:
        # Weights/biases: full (untiled) blocks, constant index_map -> fetched
        # once and kept resident in VMEM across all grid steps.
        in_specs.append(pl.BlockSpec(arr.shape, lambda i: (0, 0)))
    out_specs = pl.BlockSpec((tile_b, out_dim), lambda i: (i, 0))

    # Advisory cost estimate so XLA can overlap this mem-bound call.
    dims = [in_dim] + [w.shape[1] for w, _ in params]
    matmul_flops = 2 * batch * sum(dims[i] * dims[i + 1]
                                   for i in range(layer_num))
    elementwise_flops = 2 * batch * sum(dims[1:])
    transcendentals = batch * (
        _ACT_TRANSCENDENTALS[activation] * sum(dims[1:-1]) + dims[-1])
    bytes_accessed = (x.size * x.dtype.itemsize
                      + batch * out_dim * 4
                      + sum(a.size * a.dtype.itemsize for a in flat))

    # NOTE: no host-side padding and no output slice — Pallas handles the
    # ragged last block (masked writes; garbage rows in partial reads are
    # harmless for these purely row-wise ops).
    return pl.pallas_call(
        kernel,
        out_shape=jax.ShapeDtypeStruct((batch, out_dim), jnp.float32),
        grid=(n_tiles,),
        in_specs=in_specs,
        out_specs=out_specs,
        compiler_params=pltpu.CompilerParams(
            dimension_semantics=("parallel",),
            # With 4x lane padding + double buffering the default tile_b=4096
            # needs ~12-16 MiB, inside every generation's scoped VMEM
            # (v7x: 32 MiB default scoped / 64 MiB physical).
            vmem_limit_bytes=32 * 1024 * 1024,
        ),
        cost_estimate=pl.CostEstimate(
            flops=matmul_flops + elementwise_flops,
            transcendentals=transcendentals,
            bytes_accessed=bytes_accessed,
        ),
    )(x, *flat)


# ----------------------------- params init --------------------------------


def init_actor_params(key, input_dim, h_dim, output_dim, layer_num):
    """Deterministic init mirroring nn.Linear's U(-1/sqrt(in), 1/sqrt(in))."""
    dims = [input_dim] + [h_dim] * (layer_num - 1) + [output_dim]
    params = []
    for i in range(layer_num):
        key, kw, kb = jax.random.split(key, 3)
        fan_in, fan_out = dims[i], dims[i + 1]
        bound = 1.0 / jnp.sqrt(jnp.float32(fan_in))
        # stored as (in, out) == PyTorch weight transposed
        w = jax.random.uniform(kw, (fan_in, fan_out), jnp.float32, -bound, bound)
        b = jax.random.uniform(kb, (fan_out,), jnp.float32, -bound, bound)
        params.append((w, b))
    return params


# ----------------------------- reference (pure JAX, f32) -------------------


def actor_forward_ref(x, params, activation):
    act_fns = {
        "relu": lambda v: jnp.maximum(v, 0.0),
        "sigmoid": jax.nn.sigmoid,
        "selu": jax.nn.selu,
        "softmax": lambda v: jax.nn.softmax(v, axis=-1),
    }
    h = x.astype(jnp.float32)
    n = len(params)
    for i, (w, b) in enumerate(params):
        h = h @ w + b
        h = jax.nn.sigmoid(h) if i == n - 1 else act_fns[activation](h)
    return h


# ----------------------------- main ---------------------------------------


if __name__ == "__main__":
    # Small shapes consistent with the module:
    #   Actor(input_dim=32, h_dim=32, output_dim=8, layer_num=3, activation='relu')
    batch = 8
    input_dim = 32
    h_dim = 32
    output_dim = 8
    layer_num = 3
    activation = "relu"

    key = jax.random.PRNGKey(0)
    key, kx = jax.random.split(key)
    x = jax.random.normal(kx, (batch, input_dim), jnp.float32)
    params = init_actor_params(key, input_dim, h_dim, output_dim, layer_num)

    # Fused single-block path (grid-free).  Tolerance loosened slightly because
    # the MXU operands are bf16 (f32 accumulation).
    out = actor_forward(x, params, activation)
    out = jax.block_until_ready(out)
    ref = actor_forward_ref(x, params, activation)
    assert out.shape == (batch, output_dim)
    assert jnp.allclose(out, ref, atol=2e-2, rtol=2e-2), "mismatch vs reference"

    # Batch-tiled "parallel" path: ragged batch (no host pad / slice), x
    # streamed from HBM in bf16, >= 2 grid steps guaranteed.
    key, kx2 = jax.random.split(key)
    big_batch = 1000  # not a multiple of the tile -> exercises ragged last block
    x_big = jax.random.normal(kx2, (big_batch, input_dim), jnp.float32)
    x_big_bf16 = x_big.astype(jnp.bfloat16)
    out_big = actor_forward(x_big_bf16, params, activation, batch_tile=256)
    out_big = jax.block_until_ready(out_big)
    ref_big = actor_forward_ref(x_big, params, activation)
    assert out_big.shape == (big_batch, output_dim)
    assert jnp.allclose(out_big, ref_big, atol=2e-2, rtol=2e-2), "tiled mismatch"

    print("KERNEL_OK")
</pallas_src>

<mosaic_0001>
module attributes {stable_mosaic.version = 11 : i64} {
  func.func @_mlp_kernel(%arg0: memref<8x32xf32, #tpu.memory_space<vmem>>, %arg1: memref<32x32xbf16, #tpu.memory_space<vmem>>, %arg2: memref<1x32xf32, #tpu.memory_space<vmem>>, %arg3: memref<32x32xbf16, #tpu.memory_space<vmem>>, %arg4: memref<1x32xf32, #tpu.memory_space<vmem>>, %arg5: memref<32x8xbf16, #tpu.memory_space<vmem>>, %arg6: memref<1x8xf32, #tpu.memory_space<vmem>>, %arg7: memref<8x8xf32, #tpu.memory_space<vmem>>) attributes {dimension_semantics = [], scalar_prefetch = 0 : i64, scratch_operands = 0 : i64, tpu.core_type = #tpu.core_type<tc>} {
    %c0 = arith.constant 0 : index
    %c0_0 = arith.constant 0 : index
    %0 = vector.load %arg0[%c0, %c0_0] : memref<8x32xf32, #tpu.memory_space<vmem>>, vector<8x32xf32>
    %c0_1 = arith.constant 0 : index
    %c0_2 = arith.constant 0 : index
    %1 = vector.load %arg1[%c0_1, %c0_2] : memref<32x32xbf16, #tpu.memory_space<vmem>>, vector<32x32xbf16>
    %c0_3 = arith.constant 0 : index
    %c0_4 = arith.constant 0 : index
    %2 = vector.load %arg2[%c0_3, %c0_4] : memref<1x32xf32, #tpu.memory_space<vmem>>, vector<1x32xf32>
    %3 = arith.truncf %0 : vector<8x32xf32> to vector<8x32xbf16>
    %cst = arith.constant dense<0.000000e+00> : vector<8x32xf32>
    %4 = tpu.matmul %3, %1, %cst {dimension_numbers = #tpu.dot_dimension_numbers<[1], [0], [0], [1], [0, 0, 1, 1], [], []>} : vector<8x32xbf16>, vector<32x32xbf16>, vector<8x32xf32> -> vector<8x32xf32>
    %5 = vector.broadcast %2 : vector<1x32xf32> to vector<8x32xf32>
    %6 = arith.addf %4, %5 : vector<8x32xf32>
    %cst_5 = arith.constant 0.000000e+00 : f32
    %7 = vector.broadcast %cst_5 : f32 to vector<8x32xf32>
    %8 = arith.maximumf %6, %7 : vector<8x32xf32>
    %c0_6 = arith.constant 0 : index
    %c0_7 = arith.constant 0 : index
    %9 = vector.load %arg3[%c0_6, %c0_7] : memref<32x32xbf16, #tpu.memory_space<vmem>>, vector<32x32xbf16>
    %c0_8 = arith.constant 0 : index
    %c0_9 = arith.constant 0 : index
    %10 = vector.load %arg4[%c0_8, %c0_9] : memref<1x32xf32, #tpu.memory_space<vmem>>, vector<1x32xf32>
    %11 = arith.truncf %8 : vector<8x32xf32> to vector<8x32xbf16>
    %cst_10 = arith.constant dense<0.000000e+00> : vector<8x32xf32>
    %12 = tpu.matmul %11, %9, %cst_10 {dimension_numbers = #tpu.dot_dimension_numbers<[1], [0], [0], [1], [0, 0, 1, 1], [], []>} : vector<8x32xbf16>, vector<32x32xbf16>, vector<8x32xf32> -> vector<8x32xf32>
    %13 = vector.broadcast %10 : vector<1x32xf32> to vector<8x32xf32>
    %14 = arith.addf %12, %13 : vector<8x32xf32>
    %cst_11 = arith.constant 0.000000e+00 : f32
    %15 = vector.broadcast %cst_11 : f32 to vector<8x32xf32>
    %16 = arith.maximumf %14, %15 : vector<8x32xf32>
    %c0_12 = arith.constant 0 : index
    %c0_13 = arith.constant 0 : index
    %17 = vector.load %arg5[%c0_12, %c0_13] : memref<32x8xbf16, #tpu.memory_space<vmem>>, vector<32x8xbf16>
    %c0_14 = arith.constant 0 : index
    %c0_15 = arith.constant 0 : index
    %18 = vector.load %arg6[%c0_14, %c0_15] : memref<1x8xf32, #tpu.memory_space<vmem>>, vector<1x8xf32>
    %19 = arith.truncf %16 : vector<8x32xf32> to vector<8x32xbf16>
    %cst_16 = arith.constant dense<0.000000e+00> : vector<8x8xf32>
    %20 = tpu.matmul %19, %17, %cst_16 {dimension_numbers = #tpu.dot_dimension_numbers<[1], [0], [0], [1], [0, 0, 1, 1], [], []>} : vector<8x32xbf16>, vector<32x8xbf16>, vector<8x8xf32> -> vector<8x8xf32>
    %21 = vector.broadcast %18 : vector<1x8xf32> to vector<8x8xf32>
    %22 = arith.addf %20, %21 : vector<8x8xf32>
    %23 = arith.negf %22 : vector<8x8xf32>
    %24 = math.exp %23 : vector<8x8xf32>
    %cst_17 = arith.constant 1.000000e+00 : f32
    %25 = vector.broadcast %cst_17 : f32 to vector<8x8xf32>
    %26 = arith.addf %25, %24 : vector<8x8xf32>
    %27 = arith.divf %25, %26 : vector<8x8xf32>
    %c0_18 = arith.constant 0 : index
    %c0_19 = arith.constant 0 : index
    %28 = vector.load %arg7[%c0_18, %c0_19] : memref<8x8xf32, #tpu.memory_space<vmem>>, vector<8x8xf32>
    tpu.vector_store %arg7[%c0_18, %c0_19], %27 {strides = array<i32>} : memref<8x8xf32, #tpu.memory_space<vmem>>, vector<8x8xf32>,
    return
  }
}

</mosaic_0001>

<llo_original>
// kernel: tpu_custom_call.1
$region0: #{tpu_custom_call.1}
  #allocation0 [shape = 'u32[]', space=smem, size = 0x4, offset = 0x4, fixed_abs, tag = 'smem constant byte address 0x4 - core index']
  #allocation1 [shape = 'u32[144,128]{1,0:T(1,128)}', space=vmem, size = 0x12000, scoped, tag = 'internal scratch']
  %s0 = inlined_call_operand.hbm [shape: f32[8,32], index: 0, kind: input, shape index: {}]
  %s1 = inlined_call_operand.vmem [shape: bf16[32,32], index: 1, kind: input, shape index: {}]
  %s2 = inlined_call_operand.vmem [shape: f32[1,32], index: 2, kind: input, shape index: {}]
  %s3 = inlined_call_operand.hbm [shape: bf16[32,32], index: 3, kind: input, shape index: {}]
  %s4 = inlined_call_operand.vmem [shape: f32[1,32], index: 4, kind: input, shape index: {}]
  %s5 = inlined_call_operand.vmem [shape: bf16[32,8], index: 5, kind: input, shape index: {}]
  %s6 = inlined_call_operand.vmem [shape: f32[1,8], index: 6, kind: input, shape index: {}]
  %s7 = inlined_call_operand.hbm [shape: f32[8,8], index: 7, kind: output, shape index: {}]
  %s8 = sld [smem:[#allocation0]]
  $region46: #{tpu_custom_call.1} parent=0
    _
  %s10 = ssub.s32 1, %s8
  %s11 = scalar_select 0, %s10, %s8
  $region1: #{tpu_custom_call.1} parent=0
    #allocation2 [shape = 'u8[4096]{0}', space=vmem, size = 0x1000, scoped, tag = 'input window, operand 0, single buffered']
    #allocation3 [shape = 's32[1]{0}', space=sflag, size = 0x4, scoped, tag = 'scoped memory for tpu_custom_call.1']
    #allocation4 [shape = 's32[1]{0}', space=sflag, size = 0x4, scoped, tag = 'scoped memory for tpu_custom_call.1']
    #allocation5 [shape = 'u8[8192]{0}', space=vmem, size = 0x2000, scoped, tag = 'input window, operand 3, single buffered']
    #allocation6 [shape = 's32[1]{0}', space=sflag, size = 0x4, scoped, tag = 'scoped memory for tpu_custom_call.1']
    #allocation7 [shape = 'u8[4096]{0}', space=vmem, size = 0x1000, scoped, tag = 'output window, operand 0, single buffered']
    %12 = vsyncpa [#allocation3], 0
    %13 = vsyncpa [#allocation6], 0
    %14 = vsyncpa [#allocation4], 0
    // Predicated region
    $region2: #{tpu_custom_call.1} parent=1 // pred_check
      _
    $region3: #{tpu_custom_call.1} parent=1 // pred_check_branch
      %16 = sbr.rel (0) target = $region5
    $region4: #{tpu_custom_call.1} parent=1 // pred_region
      %s18 = ssub.s32 128, 128
      %19 = vsyncadd [#allocation3], %s18
      %s21 = sshll.u32 [#allocation2], 4
      %s22 = int_to_ptr.vmem [resolvable:$true] %s21
      %24 = dma.hbm_to_vmem [thread:$0]  %s0, 128, %s22, [#allocation3]
    $region5: #{tpu_custom_call.1} parent=1 // pred_fallthru
      _
    // Predicated region
    $region6: #{tpu_custom_call.1} parent=1 // pred_check
      _
    $region7: #{tpu_custom_call.1} parent=1 // pred_check_branch
      %26 = sbr.rel (0) target = $region9
    $region8: #{tpu_custom_call.1} parent=1 // pred_region
      _
    $region9: #{tpu_custom_call.1} parent=1 // pred_fallthru
      _
    // Predicated region
    $region10: #{tpu_custom_call.1} parent=1 // pred_check
      _
    $region11: #{tpu_custom_call.1} parent=1 // pred_check_branch
      %28 = sbr.rel (0) target = $region13
    $region12: #{tpu_custom_call.1} parent=1 // pred_region
      _
    $region13: #{tpu_custom_call.1} parent=1 // pred_fallthru
      _
    // Predicated region
    $region14: #{tpu_custom_call.1} parent=1 // pred_check
      _
    $region15: #{tpu_custom_call.1} parent=1 // pred_check_branch
      %30 = sbr.rel (0) target = $region17
    $region16: #{tpu_custom_call.1} parent=1 // pred_region
      %s32 = ssub.s32 256, 256
      %33 = vsyncadd [#allocation6], %s32
      %s34 = sshll.u32 [#allocation5], 4
      %s35 = int_to_ptr.vmem [resolvable:$true] %s34
      %40 = dma.hbm_to_vmem [thread:$0]  %s3, 256, %s35, [#allocation6], 64, 64, 4
    $region17: #{tpu_custom_call.1} parent=1 // pred_fallthru
      _
    // Predicated region
    $region18: #{tpu_custom_call.1} parent=1 // pred_check
      _
    $region19: #{tpu_custom_call.1} parent=1 // pred_check_branch
      %42 = sbr.rel (0) target = $region21
    $region20: #{tpu_custom_call.1} parent=1 // pred_region
      _
    $region21: #{tpu_custom_call.1} parent=1 // pred_fallthru
      _
    // Predicated region
    $region22: #{tpu_custom_call.1} parent=1 // pred_check
      _
    $region23: #{tpu_custom_call.1} parent=1 // pred_check_branch
      %44 = sbr.rel (0) target = $region25
    $region24: #{tpu_custom_call.1} parent=1 // pred_region
      _
    $region25: #{tpu_custom_call.1} parent=1 // pred_fallthru
      _
    // Predicated region
    $region26: #{tpu_custom_call.1} parent=1 // pred_check
      _
    $region27: #{tpu_custom_call.1} parent=1 // pred_check_branch
      %46 = sbr.rel (0) target = $region29
    $region28: #{tpu_custom_call.1} parent=1 // pred_region
      _
    $region29: #{tpu_custom_call.1} parent=1 // pred_fallthru
      _
    // Predicated region
    $region30: #{tpu_custom_call.1} parent=1 // pred_check
      _
    $region31: #{tpu_custom_call.1} parent=1 // pred_check_branch
      %48 = sbr.rel (0) target = $region33
    $region32: #{tpu_custom_call.1} parent=1 // pred_region
      %49 = dma.done [#allocation3], 128
    $region33: #{tpu_custom_call.1} parent=1 // pred_fallthru
      _
    // Predicated region
    $region34: #{tpu_custom_call.1} parent=1 // pred_check
      _
    $region35: #{tpu_custom_call.1} parent=1 // pred_check_branch
      %51 = sbr.rel (0) target = $region37
    $region36: #{tpu_custom_call.1} parent=1 // pred_region
      %52 = dma.done [#allocation6], 256
    $region37: #{tpu_custom_call.1} parent=1 // pred_fallthru
      _
    %v54 = vld [vmem:[#allocation2] sm:$0xff]
    %v55 = vld [vmem:[%s1] sm:$0xf]
    %v56 = vld [vmem:[%s1 + $0x4] sm:$0xf]
    %v57 = vld [vmem:[%s1 + $0x8] sm:$0xf]
    %v58 = vld [vmem:[%s1 + $0xc] sm:$0xf]
    %v59 = vld [vmem:[%s2] sm:$0x1]
    %v60 = vpack.c.bf16 %v54, %v54
    %v62 = vlaneseq
    %v63 = vshrl.u32 %v62, 7
    %v64 = vsub.s32 0, %v63
    %v65 = vrot.slane %v59, %v64
    %v71 = vunpack.c.l.b16 %v55
    %v72 = vunpack.c.l.b16 %v56
    %v73 = vunpack.c.l.b16 %v57
    %v74 = vunpack.c.l.b16 %v58
    %v75 = vpack.c.b16 %v72, %v71
    %v76 = vpack.c.b16 %v74, %v73
    %vm79 = vcmask 261120
    %v81 = vsel %vm79, %v60, 0
    %83 = vmatprep.subr.bf16.mxu0 0
    %84 = vmatpush1.bf16.msra.mxu0 %v75
    %85 = vmatprep.subr.bf16.mxu0 0
    %86 = vmatpush1.bf16.msra.mxu0 %v76
    %87 = vmatprep.subr.bf16.mxu0 0
    %88 = vmatpush1.bf16.msra.mxu0 0
    %89 = vmatprep.subr.bf16.mxu0 0
    %90 = vmatpush1.bf16.msra.mxu0 0
    %91 = vmatprep.subr.bf16.mxu0 0
    %92 = vmatpush1.bf16.msra.mxu0 0
    %93 = vmatprep.subr.bf16.mxu0 0
    %94 = vmatpush1.bf16.msra.mxu0 0
    %95 = vmatprep.subr.bf16.mxu0 0
    %96 = vmatpush1.bf16.msra.mxu0 0
    %97 = vmatprep.subr.bf16.mxu0 0
    %98 = vmatpush1.bf16.msra.mxu0 0
    %99 = vmatprep.subr.bf16.mxu0 0
    %100 = vmatpush1.bf16.msra.mxu0 0
    %101 = vmatprep.subr.bf16.mxu0 0
    %102 = vmatpush1.bf16.msra.mxu0 0
    %103 = vmatprep.subr.bf16.mxu0 0
    %104 = vmatpush1.bf16.msra.mxu0 0
    %105 = vmatprep.subr.bf16.mxu0 0
    %106 = vmatpush1.bf16.msra.mxu0 0
    %107 = vmatprep.subr.bf16.mxu0 0
    %108 = vmatpush1.bf16.msra.mxu0 0
    %109 = vmatprep.subr.bf16.mxu0 0
    %110 = vmatpush1.bf16.msra.mxu0 0
    %111 = vmatprep.subr.bf16.mxu0 0
    %112 = vmatpush1.bf16.msra.mxu0 0
    %113 = vmatprep.subr.bf16.mxu0 0
    %114 = vmatpush1.bf16.msra.mxu0 0
    %115 = vmatprep.mubr.bf16.mxu0 0
    %116 = vmatmul.mubr.bf16.gmra.mrb[0].mxu0 %v81
    %v117 = vpop.f32.mrb[0].mxu0
    %v118 = vadd.f32 %v65, %v117
    %v119 = vpop.f32.mrb[0].mxu0
    %v120 = vpop.f32.mrb[0].mxu0
    %v121 = vpop.f32.mrb[0].mxu0
    %122 = vdwg.mxu0
    %v123 = vmax.f32 %v118, 0.0
    %v124 = vld [vmem:[#allocation5] sm:$0xf]
    %v125 = vld [vmem:[#allocation5 + $0x4] sm:$0xf]
    %v126 = vld [vmem:[#allocation5 + $0x8] sm:$0xf]
    %v127 = vld [vmem:[#allocation5 + $0xc] sm:$0xf]
    %v128 = vld [vmem:[%s4] sm:$0x1]
    %v129 = vpack.c.bf16 %v123, %v123
    %v131 = vlaneseq
    %v132 = vshrl.u32 %v131, 7
    %v133 = vsub.s32 0, %v132
    %v134 = vrot.slane %v128, %v133
    %v140 = vunpack.c.l.b16 %v124
    %v141 = vunpack.c.l.b16 %v125
    %v142 = vunpack.c.l.b16 %v126
    %v143 = vunpack.c.l.b16 %v127
    %v144 = vpack.c.b16 %v141, %v140
    %v145 = vpack.c.b16 %v143, %v142
    %v149 = vsel %vm79, %v129, 0
    %151 = vmatprep.subr.bf16.mxu0 0
    %152 = vmatpush1.bf16.msra.mxu0 %v144
    %153 = vmatprep.subr.bf16.mxu0 0
    %154 = vmatpush1.bf16.msra.mxu0 %v145
    %155 = vmatprep.subr.bf16.mxu0 0
    %156 = vmatpush1.bf16.msra.mxu0 0
    %157 = vmatprep.subr.bf16.mxu0 0
    %158 = vmatpush1.bf16.msra.mxu0 0
    %159 = vmatprep.subr.bf16.mxu0 0
    %160 = vmatpush1.bf16.msra.mxu0 0
    %161 = vmatprep.subr.bf16.mxu0 0
    %162 = vmatpush1.bf16.msra.mxu0 0
    %163 = vmatprep.subr.bf16.mxu0 0
    %164 = vmatpush1.bf16.msra.mxu0 0
    %165 = vmatprep.subr.bf16.mxu0 0
    %166 = vmatpush1.bf16.msra.mxu0 0
    %167 = vmatprep.subr.bf16.mxu0 0
    %168 = vmatpush1.bf16.msra.mxu0 0
    %169 = vmatprep.subr.bf16.mxu0 0
    %170 = vmatpush1.bf16.msra.mxu0 0
    %171 = vmatprep.subr.bf16.mxu0 0
    %172 = vmatpush1.bf16.msra.mxu0 0
    %173 = vmatprep.subr.bf16.mxu0 0
    %174 = vmatpush1.bf16.msra.mxu0 0
    %175 = vmatprep.subr.bf16.mxu0 0
    %176 = vmatpush1.bf16.msra.mxu0 0
    %177 = vmatprep.subr.bf16.mxu0 0
    %178 = vmatpush1.bf16.msra.mxu0 0
    %179 = vmatprep.subr.bf16.mxu0 0
    %180 = vmatpush1.bf16.msra.mxu0 0
    %181 = vmatprep.subr.bf16.mxu0 0
    %182 = vmatpush1.bf16.msra.mxu0 0
    %183 = vmatprep.mubr.bf16.mxu0 0
    %184 = vmatmul.mubr.bf16.gmra.mrb[0].mxu0 %v149
    %v185 = vpop.f32.mrb[0].mxu0
    %v186 = vadd.f32 %v134, %v185
    %v187 = vpop.f32.mrb[0].mxu0
    %v188 = vpop.f32.mrb[0].mxu0
    %v189 = vpop.f32.mrb[0].mxu0
    %190 = vdwg.mxu0
    %v191 = vmax.f32 %v186, 0.0
    %v192 = vld [vmem:[%s5] sm:$0xf]
    %v193 = vld [vmem:[%s5 + $0x4] sm:$0xf]
    %v194 = vld [vmem:[%s5 + $0x8] sm:$0xf]
    %v195 = vld [vmem:[%s5 + $0xc] sm:$0xf]
    %v196 = vld [vmem:[%s6] sm:$0x1]
    %v197 = vpack.c.bf16 %v191, %v191
    %v199 = vlaneseq
    %v200 = vshrl.u32 %v199, 7
    %v201 = vsub.s32 0, %v200
    %v202 = vrot.slane %v196, %v201
    %v208 = vunpack.c.l.b16 %v192
    %v209 = vunpack.c.l.b16 %v193
    %v210 = vunpack.c.l.b16 %v194
    %v211 = vunpack.c.l.b16 %v195
    %v212 = vpack.c.b16 %v209, %v208
    %v213 = vpack.c.b16 %v211, %v210
    %v217 = vsel %vm79, %v197, 0
    %219 = vmatprep.subr.bf16.mxu0 0
    %220 = vmatpush1.bf16.msra.mxu0 %v212
    %221 = vmatprep.subr.bf16.mxu0 0
    %222 = vmatpush1.bf16.msra.mxu0 %v213
    %223 = vmatprep.subr.bf16.mxu0 0
    %224 = vmatpush1.bf16.msra.mxu0 0
    %225 = vmatprep.subr.bf16.mxu0 0
    %226 = vmatpush1.bf16.msra.mxu0 0
    %227 = vmatprep.subr.bf16.mxu0 0
    %228 = vmatpush1.bf16.msra.mxu0 0
    %229 = vmatprep.subr.bf16.mxu0 0
    %230 = vmatpush1.bf16.msra.mxu0 0
    %231 = vmatprep.subr.bf16.mxu0 0
    %232 = vmatpush1.bf16.msra.mxu0 0
    %233 = vmatprep.subr.bf16.mxu0 0
    %234 = vmatpush1.bf16.msra.mxu0 0
    %235 = vmatprep.subr.bf16.mxu0 0
    %236 = vmatpush1.bf16.msra.mxu0 0
    %237 = vmatprep.subr.bf16.mxu0 0
    %238 = vmatpush1.bf16.msra.mxu0 0
    %239 = vmatprep.subr.bf16.mxu0 0
    %240 = vmatpush1.bf16.msra.mxu0 0
    %241 = vmatprep.subr.bf16.mxu0 0
    %242 = vmatpush1.bf16.msra.mxu0 0
    %243 = vmatprep.subr.bf16.mxu0 0
    %244 = vmatpush1.bf16.msra.mxu0 0
    %245 = vmatprep.subr.bf16.mxu0 0
    %246 = vmatpush1.bf16.msra.mxu0 0
    %247 = vmatprep.subr.bf16.mxu0 0
    %248 = vmatpush1.bf16.msra.mxu0 0
    %249 = vmatprep.subr.bf16.mxu0 0
    %250 = vmatpush1.bf16.msra.mxu0 0
    %251 = vmatprep.mubr.bf16.mxu0 0
    %252 = vmatmul.mubr.bf16.gmra.mrb[0].mxu0 %v217
    %v253 = vpop.f32.mrb[0].mxu0
    %v254 = vadd.f32 %v202, %v253
    %v255 = vpop.f32.mrb[0].mxu0
    %v256 = vpop.f32.mrb[0].mxu0
    %v257 = vpop.f32.mrb[0].mxu0
    %258 = vdwg.mxu0
    %v259 = vxor.u32 %v254, 2147483648
    %v260 = vmul.f32 %v259, 1.442695
    %v261 = vpow.pop %v260
    %v262 = vadd.f32 %v261, 1.0
    %v263 = vrcp.pop %v262
    %v264 = vmul.f32 1.0, %v263
    %vm265 = vcmask 64512
    %266 = vst.msk [vmem:[#allocation7] sm:$0xff] %vm265, %v264
    // Predicated region
    $region38: #{tpu_custom_call.1} parent=1 // pred_check
      _
    $region39: #{tpu_custom_call.1} parent=1 // pred_check_branch
      %268 = sbr.rel (0) target = $region41
    $region40: #{tpu_custom_call.1} parent=1 // pred_region
      %s270 = ssub.s32 128, 128
      %271 = vsyncadd [#allocation4], %s270
      %s273 = sshll.u32 [#allocation7], 4
      %s274 = int_to_ptr.vmem [resolvable:$true] %s273
      %276 = dma.vmem_to_hbm [thread:$0]  %s274, 128, %s7, [#allocation4]
    $region41: #{tpu_custom_call.1} parent=1 // pred_fallthru
      _
    // Predicated region
    $region42: #{tpu_custom_call.1} parent=1 // pred_check
      _
    $region43: #{tpu_custom_call.1} parent=1 // pred_check_branch
      %278 = sbr.rel (0) target = $region45
    $region44: #{tpu_custom_call.1} parent=1 // pred_region
      %279 = dma.done [#allocation4], 128
    $region45: #{tpu_custom_call.1} parent=1 // pred_fallthru
      _
    %280 = vsyncpa [#allocation3], 1
    %281 = vsyncpa [#allocation6], 1
    %282 = vsyncpa [#allocation4], 1

</llo_original>
